<compile_context>
chip_gen: v7x
topology: tpu7x:2x2x1
jax: 0.10.0
libtpu: 0.0.40
codegen_flags: <defaults>
</compile_context>

<pallas_src>
import functools

import jax
import jax.numpy as jnp
from jax.experimental import pallas as pl
from jax.experimental.pallas import tpu as pltpu


# ---------------------------------------------------------------------------
# one-time weight fold (call once at module init, NOT per forward call)
# ---------------------------------------------------------------------------
def _block_diag(blocks):
    """(g, a, b) per-part blocks -> (g*a, g*b) block-diagonal matrix."""
    g, a, b = blocks.shape
    eye = jnp.eye(g, dtype=blocks.dtype)
    return jnp.einsum('gab,gG->gaGb', blocks, eye).reshape(g * a, g * b)


def _rows_to_channel_major(w, h, c):
    """Permute rows of an (h*c, N) matrix from part-major index (p*c + ci) to
    channel-major (ci*h + p), so it consumes a plain reshape of (..., c, h)."""
    n_cols = w.shape[1]
    return w.reshape(h, c, n_cols).transpose(1, 0, 2).reshape(h * c, n_cols)


def precompute_cta_weights(wv, wk1, wk2, matmul_dtype=jnp.bfloat16):
    """wv: (h, c, 2c), wk1: (h, m, 2c), wk2: (h, 1, m) grouped-conv weights.

    Returns (wvk, wk2b, e):
      wvk  : (2*h*c, h*c + h*m) fused [value | key-conv1] weight, rows ordered
             [y lanes ; gt lanes] in channel-major layout, cast to matmul_dtype
      wk2b : (h*m, h) block-diagonal key-conv2 weight (f32)
      e    : (h, h*c) 0/1 part->channel expansion matrix (f32)
    """
    h, c, _ = wv.shape
    # W @ [y ; gt+y] == (Wa+Wb) @ y + Wb @ gt  (fold the residual add)
    wva, wvb = wv[:, :, :c], wv[:, :, c:]
    wk1a, wk1b = wk1[:, :, :c], wk1[:, :, c:]

    wvy = _rows_to_channel_major(_block_diag(jnp.transpose(wva + wvb, (0, 2, 1))), h, c)
    wvg = _rows_to_channel_major(_block_diag(jnp.transpose(wvb, (0, 2, 1))), h, c)
    wk1y = _rows_to_channel_major(_block_diag(jnp.transpose(wk1a + wk1b, (0, 2, 1))), h, c)
    wk1g = _rows_to_channel_major(_block_diag(jnp.transpose(wk1b, (0, 2, 1))), h, c)

    wv_full = jnp.concatenate([wvy, wvg], axis=0)     # (2hc, hc)   rows: [y ; gt]
    wk1_full = jnp.concatenate([wk1y, wk1g], axis=0)  # (2hc, hm)
    wvk = jnp.concatenate([wv_full, wk1_full], axis=1).astype(matmul_dtype)  # (2hc, hc+hm)

    wk2b = _block_diag(jnp.transpose(wk2, (0, 2, 1))).astype(jnp.float32)    # (hm, h)
    e = jnp.kron(jnp.eye(h, dtype=jnp.float32),
                 jnp.ones((1, c), jnp.float32))                              # (h, hc)
    return wvk, wk2b, e


# ---------------------------------------------------------------------------
# kernel
# ---------------------------------------------------------------------------
def cta_kernel(y_ref, g_ref, wvk_ref, wk2_ref, e_ref, o_ref, *, n, s, hc):
    # activations: (n*s, hc) f32, channel-major lanes (plain reshape of input)
    x = jnp.concatenate([y_ref[...], g_ref[...]], axis=-1)           # (n*s, 2*hc)
    xb = x.astype(wvk_ref.dtype)                                     # bf16 MXU inputs

    # fused [value | key-conv1]: one matmul, K = 2*hc, N = hc + hm, f32 acc
    vk = jnp.dot(xb, wvk_ref[...], preferred_element_type=jnp.float32)
    v = vk[:, :hc]                                                   # (n*s, hc)
    k1 = vk[:, hc:]                                                  # (n*s, hm)
    k1 = jnp.where(k1 >= 0, k1, 0.01 * k1)                           # LeakyReLU(0.01)

    score = jax.nn.sigmoid(
        jnp.dot(k1, wk2_ref[...], preferred_element_type=jnp.float32))      # (n*s, h)
    score_b = jnp.dot(score, e_ref[...],
                      preferred_element_type=jnp.float32)            # (n*s, hc)

    # segmented temporal sums over s (tile-aligned sublane reduce per sample)
    num = jnp.sum((v * score_b).reshape(n, s, hc), axis=1)           # (n, hc)
    den = jnp.dot(jnp.sum(score.reshape(n, s, -1), axis=1), e_ref[...],
                  preferred_element_type=jnp.float32)                # (n, hc)

    # exact division (cheap; avoids the approx-reciprocal accuracy concern)
    o_ref[...] = (num / den).astype(o_ref.dtype)                     # (n, hc) lane-dense


# ---------------------------------------------------------------------------
# wrapper (per-call work = plain reshapes + one pallas_call + tiny transpose)
# ---------------------------------------------------------------------------
@jax.jit
def c_ta_forward(y, gt, wvk, wk2b, e):
    """y, gt: (n, s, c, h) f32; wvk/wk2b/e from precompute_cta_weights.
    Returns (h, n, c), matching the PyTorch module output."""
    n, s, c, h = y.shape
    hc = h * c
    hm = wk2b.shape[0]
    ns = n * s

    # plain reshapes — the channel/part permutation lives in the folded weights
    yd = y.reshape(ns, hc)
    gd = gt.reshape(ns, hc)

    kernel = functools.partial(cta_kernel, n=n, s=s, hc=hc)
    zero2 = lambda i: (0, 0)   # single grid step; everything is one full block
    out = pl.pallas_call(
        kernel,
        out_shape=jax.ShapeDtypeStruct((n, hc), jnp.float32),
        grid_spec=pltpu.PrefetchScalarGridSpec(
            num_scalar_prefetch=0,
            grid=(1,),
            in_specs=[
                pl.BlockSpec((ns, hc), zero2),            # y lanes
                pl.BlockSpec((ns, hc), zero2),            # gt lanes
                pl.BlockSpec((2 * hc, hc + hm), zero2),   # fused value|key1 weight
                pl.BlockSpec((hm, h), zero2),             # key2 weight
                pl.BlockSpec((h, hc), zero2),             # score expansion
            ],
            out_specs=pl.BlockSpec((n, hc), zero2),
        ),
    )(yd, gd, wvk, wk2b, e)

    # (n, h*c) part-major -> (h, n, c)
    return jnp.transpose(out.reshape(n, h, c), (1, 0, 2))


# ---------------------------------------------------------------------------
# pure-JAX reference mirroring the PyTorch math
# ---------------------------------------------------------------------------
def c_ta_reference(y, gt, wv, wk1, wk2):
    gt2 = gt + y
    y_t = jnp.transpose(y, (3, 0, 2, 1))                           # (h, n, c, s)
    g_t = jnp.transpose(gt2, (3, 0, 2, 1))
    x = jnp.concatenate([y_t, g_t], axis=2)                        # (h, n, 2c, s)
    k1 = jnp.einsum('hmc,hncs->hnms', wk1, x)
    k1 = jnp.where(k1 >= 0, k1, 0.01 * k1)
    score = jax.nn.sigmoid(jnp.einsum('hom,hnms->hnos', wk2, k1))  # (h, n, 1, s)
    v = jnp.einsum('hoc,hncs->hnos', wv, x)                        # (h, n, c, s)
    return jnp.sum(v * score, -1) / jnp.sum(score, -1)             # (h, n, c)


if __name__ == "__main__":
    # module config: in_planes = c, part_num = h
    n, s, c, h = 2, 8, 32, 4
    m = (2 * c) // 16  # per-group hidden width of the key branch

    key = jax.random.PRNGKey(0)
    ka, kb, kc, kd, ke = jax.random.split(key, 5)

    y = jax.random.normal(ka, (n, s, c, h), dtype=jnp.float32)
    gt = jax.random.normal(kb, (n, s, c, h), dtype=jnp.float32)

    # grouped 1x1 conv weights (no bias):
    #   value: per part (c, 2c); key conv1: per part (m, 2c); key conv2: per part (1, m)
    wv = 0.1 * jax.random.normal(kc, (h, c, 2 * c), dtype=jnp.float32)
    wk1 = 0.1 * jax.random.normal(kd, (h, m, 2 * c), dtype=jnp.float32)
    wk2 = 0.1 * jax.random.normal(ke, (h, 1, m), dtype=jnp.float32)

    # one-time weight fold (hoisted out of the per-call path)
    wvk, wk2b, e = precompute_cta_weights(wv, wk1, wk2, matmul_dtype=jnp.bfloat16)

    out = jax.block_until_ready(c_ta_forward(y, gt, wvk, wk2b, e))
    ref = c_ta_reference(y, gt, wv, wk1, wk2)

    assert out.shape == (h, n, c)
    # bf16 MXU inputs (f32 accumulation) loosen the match slightly vs the
    # pure-f32 reference; errors observed are a few e-3.
    assert jnp.allclose(out, ref, atol=2e-2, rtol=2e-2), \
        float(jnp.max(jnp.abs(out - ref)))

    print("KERNEL_OK")
</pallas_src>

<mosaic_0001>
module attributes {stable_mosaic.version = 11 : i64} {
  func.func @cta_kernel(%arg0: i32, %arg1: memref<16x128xf32, #tpu.memory_space<vmem>>, %arg2: memref<16x128xf32, #tpu.memory_space<vmem>>, %arg3: memref<256x144xbf16, #tpu.memory_space<vmem>>, %arg4: memref<16x4xf32, #tpu.memory_space<vmem>>, %arg5: memref<4x128xf32, #tpu.memory_space<vmem>>, %arg6: memref<2x128xf32, #tpu.memory_space<vmem>>) attributes {dimension_semantics = [#tpu.dimension_semantics<arbitrary>], iteration_bounds = array<i64: 1>, scalar_prefetch = 0 : i64, scratch_operands = 0 : i64, tpu.core_type = #tpu.core_type<tc>, window_params = [{pipeline_mode = #tpu.pipeline_mode<synchronous>, transform_indices = @transform_0, window_bounds = array<i64: 16, 128>}, {pipeline_mode = #tpu.pipeline_mode<synchronous>, transform_indices = @transform_1, window_bounds = array<i64: 16, 128>}, {pipeline_mode = #tpu.pipeline_mode<synchronous>, transform_indices = @transform_2, window_bounds = array<i64: 256, 144>}, {pipeline_mode = #tpu.pipeline_mode<synchronous>, transform_indices = @transform_3, window_bounds = array<i64: 16, 4>}, {pipeline_mode = #tpu.pipeline_mode<synchronous>, transform_indices = @transform_4, window_bounds = array<i64: 4, 128>}, {pipeline_mode = #tpu.pipeline_mode<synchronous>, transform_indices = @transform_5, window_bounds = array<i64: 2, 128>}]} {
    %c0 = arith.constant 0 : index
    %c0_0 = arith.constant 0 : index
    %0 = vector.load %arg1[%c0, %c0_0] : memref<16x128xf32, #tpu.memory_space<vmem>>, vector<16x128xf32>
    %c0_1 = arith.constant 0 : index
    %c0_2 = arith.constant 0 : index
    %1 = vector.load %arg2[%c0_1, %c0_2] : memref<16x128xf32, #tpu.memory_space<vmem>>, vector<16x128xf32>
    %2 = tpu.concatenate %0, %1 in 1 : vector<16x128xf32>, vector<16x128xf32> -> vector<16x256xf32>
    %3 = arith.truncf %2 : vector<16x256xf32> to vector<16x256xbf16>
    %c0_3 = arith.constant 0 : index
    %c0_4 = arith.constant 0 : index
    %4 = vector.load %arg3[%c0_3, %c0_4] : memref<256x144xbf16, #tpu.memory_space<vmem>>, vector<256x144xbf16>
    %cst = arith.constant dense<0.000000e+00> : vector<16x144xf32>
    %5 = tpu.matmul %3, %4, %cst {dimension_numbers = #tpu.dot_dimension_numbers<[1], [0], [0], [1], [0, 0, 1, 1], [], []>} : vector<16x256xbf16>, vector<256x144xbf16>, vector<16x144xf32> -> vector<16x144xf32>
    %6 = vector.extract_strided_slice %5 {offsets = [0, 0], sizes = [16, 128], strides = [1, 1]} : vector<16x144xf32> to vector<16x128xf32>
    %7 = vector.extract_strided_slice %5 {offsets = [0, 128], sizes = [16, 16], strides = [1, 1]} : vector<16x144xf32> to vector<16x16xf32>
    %cst_5 = arith.constant 0.000000e+00 : f32
    %8 = vector.broadcast %cst_5 : f32 to vector<16x16xf32>
    %9 = arith.cmpf oge, %7, %8 : vector<16x16xf32>
    %cst_6 = arith.constant 0.00999999977 : f32
    %10 = vector.broadcast %cst_6 : f32 to vector<16x16xf32>
    %11 = arith.mulf %10, %7 : vector<16x16xf32>
    %12 = arith.select %9, %7, %11 : vector<16x16xi1>, vector<16x16xf32>
    %c0_7 = arith.constant 0 : index
    %c0_8 = arith.constant 0 : index
    %13 = vector.load %arg4[%c0_7, %c0_8] : memref<16x4xf32, #tpu.memory_space<vmem>>, vector<16x4xf32>
    %cst_9 = arith.constant dense<0.000000e+00> : vector<16x4xf32>
    %14 = tpu.matmul %12, %13, %cst_9 {dimension_numbers = #tpu.dot_dimension_numbers<[1], [0], [0], [1], [0, 0, 1, 1], [], []>} : vector<16x16xf32>, vector<16x4xf32>, vector<16x4xf32> -> vector<16x4xf32>
    %15 = arith.negf %14 : vector<16x4xf32>
    %16 = math.exp %15 : vector<16x4xf32>
    %cst_10 = arith.constant 1.000000e+00 : f32
    %17 = vector.broadcast %cst_10 : f32 to vector<16x4xf32>
    %18 = arith.addf %17, %16 : vector<16x4xf32>
    %19 = arith.divf %17, %18 : vector<16x4xf32>
    %c0_11 = arith.constant 0 : index
    %c0_12 = arith.constant 0 : index
    %20 = vector.load %arg5[%c0_11, %c0_12] : memref<4x128xf32, #tpu.memory_space<vmem>>, vector<4x128xf32>
    %cst_13 = arith.constant dense<0.000000e+00> : vector<16x128xf32>
    %21 = tpu.matmul %19, %20, %cst_13 {dimension_numbers = #tpu.dot_dimension_numbers<[1], [0], [0], [1], [0, 0, 1, 1], [], []>} : vector<16x4xf32>, vector<4x128xf32>, vector<16x128xf32> -> vector<16x128xf32>
    %22 = arith.mulf %6, %21 : vector<16x128xf32>
    %23 = vector.shape_cast %22 : vector<16x128xf32> to vector<2x8x128xf32>
    %cst_14 = arith.constant dense<0.000000e+00> : vector<2x128xf32>
    %24 = vector.multi_reduction <add>, %23, %cst_14 [1] : vector<2x8x128xf32> to vector<2x128xf32>
    %25 = vector.shape_cast %19 : vector<16x4xf32> to vector<2x8x4xf32>
    %cst_15 = arith.constant dense<0.000000e+00> : vector<2x4xf32>
    %26 = vector.multi_reduction <add>, %25, %cst_15 [1] : vector<2x8x4xf32> to vector<2x4xf32>
    %c0_16 = arith.constant 0 : index
    %c0_17 = arith.constant 0 : index
    %27 = vector.load %arg5[%c0_16, %c0_17] : memref<4x128xf32, #tpu.memory_space<vmem>>, vector<4x128xf32>
    %cst_18 = arith.constant dense<0.000000e+00> : vector<2x128xf32>
    %28 = tpu.matmul %26, %27, %cst_18 {dimension_numbers = #tpu.dot_dimension_numbers<[1], [0], [0], [1], [0, 0, 1, 1], [], []>} : vector<2x4xf32>, vector<4x128xf32>, vector<2x128xf32> -> vector<2x128xf32>
    %29 = arith.divf %24, %28 : vector<2x128xf32>
    %c0_19 = arith.constant 0 : index
    %c0_20 = arith.constant 0 : index
    %30 = vector.load %arg6[%c0_19, %c0_20] : memref<2x128xf32, #tpu.memory_space<vmem>>, vector<2x128xf32>
    tpu.vector_store %arg6[%c0_19, %c0_20], %29 {strides = array<i32>} : memref<2x128xf32, #tpu.memory_space<vmem>>, vector<2x128xf32>,
    return
  }
  func.func @transform_0(%arg0: i32) -> (i32, i32) {
    %c0_i32 = arith.constant 0 : i32
    %c0_i32_0 = arith.constant 0 : i32
    %c0_i32_1 = arith.constant 0 : i32
    return %c0_i32, %c0_i32_0 : i32, i32
  }
  func.func @transform_1(%arg0: i32) -> (i32, i32) {
    %c0_i32 = arith.constant 0 : i32
    %c0_i32_0 = arith.constant 0 : i32
    %c0_i32_1 = arith.constant 0 : i32
    return %c0_i32, %c0_i32_0 : i32, i32
  }
  func.func @transform_2(%arg0: i32) -> (i32, i32) {
    %c0_i32 = arith.constant 0 : i32
    %c0_i32_0 = arith.constant 0 : i32
    %c0_i32_1 = arith.constant 0 : i32
    return %c0_i32, %c0_i32_0 : i32, i32
  }
  func.func @transform_3(%arg0: i32) -> (i32, i32) {
    %c0_i32 = arith.constant 0 : i32
    %c0_i32_0 = arith.constant 0 : i32
    %c0_i32_1 = arith.constant 0 : i32
    return %c0_i32, %c0_i32_0 : i32, i32
  }
  func.func @transform_4(%arg0: i32) -> (i32, i32) {
    %c0_i32 = arith.constant 0 : i32
    %c0_i32_0 = arith.constant 0 : i32
    %c0_i32_1 = arith.constant 0 : i32
    return %c0_i32, %c0_i32_0 : i32, i32
  }
  func.func @transform_5(%arg0: i32) -> (i32, i32) {
    %c0_i32 = arith.constant 0 : i32
    %c0_i32_0 = arith.constant 0 : i32
    %c0_i32_1 = arith.constant 0 : i32
    return %c0_i32, %c0_i32_0 : i32, i32
  }
}

</mosaic_0001>

<llo_original>
// kernel: c_ta_forward.1
$region0: #{c_ta_forward.1}
  #allocation0 [shape = 'u32[]', space=smem, size = 0x4, offset = 0x4, fixed_abs, tag = 'smem constant byte address 0x4 - core index']
  #allocation1 [shape = 'u32[144,128]{1,0:T(1,128)}', space=vmem, size = 0x12000, scoped, tag = 'internal scratch']
  %s0 = inlined_call_operand.vmem [shape: f32[16,128], index: 0, kind: input, shape index: {}]
  %s1 = inlined_call_operand.vmem [shape: f32[16,128], index: 1, kind: input, shape index: {}]
  %s2 = inlined_call_operand.vmem [shape: bf16[256,144], index: 2, kind: input, shape index: {}]
  %s3 = inlined_call_operand.vmem [shape: f32[16,4], index: 3, kind: input, shape index: {}]
  %s4 = inlined_call_operand.vmem [shape: f32[4,128], index: 4, kind: input, shape index: {}]
  %s5 = inlined_call_operand.vmem [shape: f32[2,128], index: 5, kind: output, shape index: {}]
  %s6 = sld [smem:[#allocation0]]
  $region30: #{c_ta_forward.1} parent=0
    _
  %s8 = ssub.s32 1, %s6
  %s9 = scalar_select 0, %s8, %s6
  // Predicated region
  $region2: #{c_ta_forward.1} parent=0 // pred_check
    _
  $region3: #{c_ta_forward.1} parent=0 // pred_check_branch
    %11 = sbr.rel (0) target = $region5
  $region4: #{c_ta_forward.1} parent=0 // pred_region
    _
  $region5: #{c_ta_forward.1} parent=0 // pred_fallthru
    _
  // Predicated region
  $region6: #{c_ta_forward.1} parent=0 // pred_check
    _
  $region7: #{c_ta_forward.1} parent=0 // pred_check_branch
    %13 = sbr.rel (0) target = $region9
  $region8: #{c_ta_forward.1} parent=0 // pred_region
    _
  $region9: #{c_ta_forward.1} parent=0 // pred_fallthru
    _
  // Predicated region
  $region10: #{c_ta_forward.1} parent=0 // pred_check
    _
  $region11: #{c_ta_forward.1} parent=0 // pred_check_branch
    %15 = sbr.rel (0) target = $region13
  $region12: #{c_ta_forward.1} parent=0 // pred_region
    _
  $region13: #{c_ta_forward.1} parent=0 // pred_fallthru
    _
  // Predicated region
  $region14: #{c_ta_forward.1} parent=0 // pred_check
    _
  $region15: #{c_ta_forward.1} parent=0 // pred_check_branch
    %17 = sbr.rel (0) target = $region17
  $region16: #{c_ta_forward.1} parent=0 // pred_region
    _
  $region17: #{c_ta_forward.1} parent=0 // pred_fallthru
    _
  // Predicated region
  $region18: #{c_ta_forward.1} parent=0 // pred_check
    _
  $region19: #{c_ta_forward.1} parent=0 // pred_check_branch
    %19 = sbr.rel (0) target = $region21
  $region20: #{c_ta_forward.1} parent=0 // pred_region
    _
  $region21: #{c_ta_forward.1} parent=0 // pred_fallthru
    _
  %v20 = vld [vmem:[%s0] sm:$0xff]
  %v21 = vld [vmem:[%s0 + $0x8] sm:$0xff]
  %v22 = vld [vmem:[%s1] sm:$0xff]
  %v23 = vld [vmem:[%s1 + $0x8] sm:$0xff]
  %v24 = vpack.c.bf16 %v21, %v20
  %v25 = vpack.c.bf16 %v23, %v22
  %v26 = vld [vmem:[%s2] sm:$0xff]
  %v27 = vld [vmem:[%s2 + $0x8] sm:$0xff]
  %v28 = vld [vmem:[%s2 + $0x10] sm:$0xff]
  %v29 = vld [vmem:[%s2 + $0x18] sm:$0xff]
  %v30 = vld [vmem:[%s2 + $0x20] sm:$0xff]
  %v31 = vld [vmem:[%s2 + $0x28] sm:$0xff]
  %v32 = vld [vmem:[%s2 + $0x30] sm:$0xff]
  %v33 = vld [vmem:[%s2 + $0x38] sm:$0xff]
  %v34 = vld [vmem:[%s2 + $0x40] sm:$0xff]
  %v35 = vld [vmem:[%s2 + $0x48] sm:$0xff]
  %v36 = vld [vmem:[%s2 + $0x50] sm:$0xff]
  %v37 = vld [vmem:[%s2 + $0x58] sm:$0xff]
  %v38 = vld [vmem:[%s2 + $0x60] sm:$0xff]
  %v39 = vld [vmem:[%s2 + $0x68] sm:$0xff]
  %v40 = vld [vmem:[%s2 + $0x70] sm:$0xff]
  %v41 = vld [vmem:[%s2 + $0x78] sm:$0xff]
  %v42 = vld [vmem:[%s2 + $0x80] sm:$0xff]
  %v43 = vld [vmem:[%s2 + $0x88] sm:$0xff]
  %v44 = vld [vmem:[%s2 + $0x90] sm:$0xff]
  %v45 = vld [vmem:[%s2 + $0x98] sm:$0xff]
  %v46 = vld [vmem:[%s2 + $0xa0] sm:$0xff]
  %v47 = vld [vmem:[%s2 + $0xa8] sm:$0xff]
  %v48 = vld [vmem:[%s2 + $0xb0] sm:$0xff]
  %v49 = vld [vmem:[%s2 + $0xb8] sm:$0xff]
  %v50 = vld [vmem:[%s2 + $0xc0] sm:$0xff]
  %v51 = vld [vmem:[%s2 + $0xc8] sm:$0xff]
  %v52 = vld [vmem:[%s2 + $0xd0] sm:$0xff]
  %v53 = vld [vmem:[%s2 + $0xd8] sm:$0xff]
  %v54 = vld [vmem:[%s2 + $0xe0] sm:$0xff]
  %v55 = vld [vmem:[%s2 + $0xe8] sm:$0xff]
  %v56 = vld [vmem:[%s2 + $0xf0] sm:$0xff]
  %v57 = vld [vmem:[%s2 + $0xf8] sm:$0xff]
  %v90 = vunpack.c.l.b16 %v26
  %v91 = vunpack.c.h.b16 %v26
  %v92 = vunpack.c.l.b16 %v27
  %v93 = vunpack.c.h.b16 %v27
  %v94 = vunpack.c.l.b16 %v28
  %v95 = vunpack.c.h.b16 %v28
  %v96 = vunpack.c.l.b16 %v29
  %v97 = vunpack.c.h.b16 %v29
  %v98 = vunpack.c.l.b16 %v30
  %v99 = vunpack.c.h.b16 %v30
  %v100 = vunpack.c.l.b16 %v31
  %v101 = vunpack.c.h.b16 %v31
  %v102 = vunpack.c.l.b16 %v32
  %v103 = vunpack.c.h.b16 %v32
  %v104 = vunpack.c.l.b16 %v33
  %v105 = vunpack.c.h.b16 %v33
  %v106 = vunpack.c.l.b16 %v34
  %v107 = vunpack.c.h.b16 %v34
  %v108 = vunpack.c.l.b16 %v35
  %v109 = vunpack.c.h.b16 %v35
  %v110 = vunpack.c.l.b16 %v36
  %v111 = vunpack.c.h.b16 %v36
  %v112 = vunpack.c.l.b16 %v37
  %v113 = vunpack.c.h.b16 %v37
  %v114 = vunpack.c.l.b16 %v38
  %v115 = vunpack.c.h.b16 %v38
  %v116 = vunpack.c.l.b16 %v39
  %v117 = vunpack.c.h.b16 %v39
  %v118 = vunpack.c.l.b16 %v40
  %v119 = vunpack.c.h.b16 %v40
  %v120 = vunpack.c.l.b16 %v41
  %v121 = vunpack.c.h.b16 %v41
  %v122 = vunpack.c.l.b16 %v42
  %v123 = vunpack.c.h.b16 %v42
  %v124 = vunpack.c.l.b16 %v43
  %v125 = vunpack.c.h.b16 %v43
  %v126 = vunpack.c.l.b16 %v44
  %v127 = vunpack.c.h.b16 %v44
  %v128 = vunpack.c.l.b16 %v45
  %v129 = vunpack.c.h.b16 %v45
  %v130 = vunpack.c.l.b16 %v46
  %v131 = vunpack.c.h.b16 %v46
  %v132 = vunpack.c.l.b16 %v47
  %v133 = vunpack.c.h.b16 %v47
  %v134 = vunpack.c.l.b16 %v48
  %v135 = vunpack.c.h.b16 %v48
  %v136 = vunpack.c.l.b16 %v49
  %v137 = vunpack.c.h.b16 %v49
  %v138 = vunpack.c.l.b16 %v50
  %v139 = vunpack.c.h.b16 %v50
  %v140 = vunpack.c.l.b16 %v51
  %v141 = vunpack.c.h.b16 %v51
  %v142 = vunpack.c.l.b16 %v52
  %v143 = vunpack.c.h.b16 %v52
  %v144 = vunpack.c.l.b16 %v53
  %v145 = vunpack.c.h.b16 %v53
  %v146 = vunpack.c.l.b16 %v54
  %v147 = vunpack.c.h.b16 %v54
  %v148 = vunpack.c.l.b16 %v55
  %v149 = vunpack.c.h.b16 %v55
  %v150 = vunpack.c.l.b16 %v56
  %v151 = vunpack.c.h.b16 %v56
  %v152 = vunpack.c.l.b16 %v57
  %v153 = vunpack.c.h.b16 %v57
  %v154 = vpack.c.b16 %v92, %v90
  %v155 = vpack.c.b16 %v93, %v91
  %v156 = vpack.c.b16 %v96, %v94
  %v157 = vpack.c.b16 %v97, %v95
  %v158 = vpack.c.b16 %v100, %v98
  %v159 = vpack.c.b16 %v101, %v99
  %v160 = vpack.c.b16 %v104, %v102
  %v161 = vpack.c.b16 %v105, %v103
  %v162 = vpack.c.b16 %v108, %v106
  %v163 = vpack.c.b16 %v109, %v107
  %v164 = vpack.c.b16 %v112, %v110
  %v165 = vpack.c.b16 %v113, %v111
  %v166 = vpack.c.b16 %v116, %v114
  %v167 = vpack.c.b16 %v117, %v115
  %v168 = vpack.c.b16 %v120, %v118
  %v169 = vpack.c.b16 %v121, %v119
  %v170 = vpack.c.b16 %v124, %v122
  %v171 = vpack.c.b16 %v125, %v123
  %v172 = vpack.c.b16 %v128, %v126
  %v173 = vpack.c.b16 %v129, %v127
  %v174 = vpack.c.b16 %v132, %v130
  %v175 = vpack.c.b16 %v133, %v131
  %v176 = vpack.c.b16 %v136, %v134
  %v177 = vpack.c.b16 %v137, %v135
  %v178 = vpack.c.b16 %v140, %v138
  %v179 = vpack.c.b16 %v141, %v139
  %v180 = vpack.c.b16 %v144, %v142
  %v181 = vpack.c.b16 %v145, %v143
  %v182 = vpack.c.b16 %v148, %v146
  %v183 = vpack.c.b16 %v149, %v147
  %v184 = vpack.c.b16 %v152, %v150
  %v185 = vpack.c.b16 %v153, %v151
  %218 = vmatprep.subr.bf16.mxu0 %v155
  %219 = vmatpush1.bf16.msra.mxu0 %v154
  %220 = vmatprep.subr.bf16.mxu0 %v157
  %221 = vmatpush1.bf16.msra.mxu0 %v156
  %222 = vmatprep.subr.bf16.mxu0 %v159
  %223 = vmatpush1.bf16.msra.mxu0 %v158
  %224 = vmatprep.subr.bf16.mxu0 %v161
  %225 = vmatpush1.bf16.msra.mxu0 %v160
  %226 = vmatprep.subr.bf16.mxu0 %v163
  %227 = vmatpush1.bf16.msra.mxu0 %v162
  %228 = vmatprep.subr.bf16.mxu0 %v165
  %229 = vmatpush1.bf16.msra.mxu0 %v164
  %230 = vmatprep.subr.bf16.mxu0 %v167
  %231 = vmatpush1.bf16.msra.mxu0 %v166
  %232 = vmatprep.subr.bf16.mxu0 %v169
  %233 = vmatpush1.bf16.msra.mxu0 %v168
  %234 = vmatprep.subr.bf16.mxu0 %v171
  %235 = vmatpush1.bf16.msra.mxu0 %v170
  %236 = vmatprep.subr.bf16.mxu0 %v173
  %237 = vmatpush1.bf16.msra.mxu0 %v172
  %238 = vmatprep.subr.bf16.mxu0 %v175
  %239 = vmatpush1.bf16.msra.mxu0 %v174
  %240 = vmatprep.subr.bf16.mxu0 %v177
  %241 = vmatpush1.bf16.msra.mxu0 %v176
  %242 = vmatprep.subr.bf16.mxu0 %v179
  %243 = vmatpush1.bf16.msra.mxu0 %v178
  %244 = vmatprep.subr.bf16.mxu0 %v181
  %245 = vmatpush1.bf16.msra.mxu0 %v180
  %246 = vmatprep.subr.bf16.mxu0 %v183
  %247 = vmatpush1.bf16.msra.mxu0 %v182
  %248 = vmatprep.subr.bf16.mxu0 %v185
  %249 = vmatpush1.bf16.msra.mxu0 %v184
  %250 = vmatprep.mubr.bf16.mxu0 %v25
  %251 = vmatmul.mubr.bf16.gmra.mrb[0].mxu0 %v24
  %v252 = vpop.f32.mrb[0].mxu0
  %v253 = vadd.f32 0.0, %v252
  %v254 = vpop.f32.mrb[0].mxu0
  %v255 = vadd.f32 0.0, %v254
  %v256 = vpop.f32.mrb[0].mxu0
  %v257 = vadd.f32 0.0, %v256
  %v258 = vpop.f32.mrb[0].mxu0
  %v259 = vadd.f32 0.0, %v258
  %260 = vdwg.mxu0
  %vm261 = vcmp.ge.f32.partialorder %v255, 0.0
  %vm262 = vcmp.ge.f32.partialorder %v259, 0.0
  %v263 = vmul.f32 %v255, 0.01
  %v264 = vmul.f32 %v259, 0.01
  %v265 = vsel %vm261, %v255, %v263
  %v266 = vsel %vm262, %v259, %v264
  %v267 = vld [vmem:[%s3] sm:$0xff]
  %v268 = vld [vmem:[%s3 + $0x8] sm:$0xff]
  %vm269 = vcmask 130048
  %v271 = vsel %vm269, %v265, 0
  %v274 = vsel %vm269, %v266, 0
  %276 = vmatprep.subr.mxu0 0.0
  %277 = vmatpush1.msra.mxu0 %v267
  %278 = vmatprep.subr.mxu0 0.0
  %279 = vmatpush1.msra.mxu0 %v268
  %280 = vmatprep.subr.mxu0 0.0
  %281 = vmatpush1.msra.mxu0 0.0
  %282 = vmatprep.subr.mxu0 0.0
  %283 = vmatpush1.msra.mxu0 0.0
  %284 = vmatprep.subr.mxu0 0.0
  %285 = vmatpush1.msra.mxu0 0.0
  %286 = vmatprep.subr.mxu0 0.0
  %287 = vmatpush1.msra.mxu0 0.0
  %288 = vmatprep.subr.mxu0 0.0
  %289 = vmatpush1.msra.mxu0 0.0
  %290 = vmatprep.subr.mxu0 0.0
  %291 = vmatpush1.msra.mxu0 0.0
  %292 = vmatprep.subr.mxu0 0.0
  %293 = vmatpush1.msra.mxu0 0.0
  %294 = vmatprep.subr.mxu0 0.0
  %295 = vmatpush1.msra.mxu0 0.0
  %296 = vmatprep.subr.mxu0 0.0
  %297 = vmatpush1.msra.mxu0 0.0
  %298 = vmatprep.subr.mxu0 0.0
  %299 = vmatpush1.msra.mxu0 0.0
  %300 = vmatprep.subr.mxu0 0.0
  %301 = vmatpush1.msra.mxu0 0.0
  %302 = vmatprep.subr.mxu0 0.0
  %303 = vmatpush1.msra.mxu0 0.0
  %304 = vmatprep.subr.mxu0 0.0
  %305 = vmatpush1.msra.mxu0 0.0
  %306 = vmatprep.subr.mxu0 0.0
  %307 = vmatpush1.msra.mxu0 0.0
  %308 = vmatprep.subr.mxu0 0.0
  %309 = vmatpush1.msra.mxu0 0.0
  %310 = vmatprep.subr.mxu0 0.0
  %311 = vmatpush1.msra.mxu0 0.0
  %312 = vmatprep.subr.mxu0 0.0
  %313 = vmatpush1.msra.mxu0 0.0
  %314 = vmatprep.subr.mxu0 0.0
  %315 = vmatpush1.msra.mxu0 0.0
  %316 = vmatprep.subr.mxu0 0.0
  %317 = vmatpush1.msra.mxu0 0.0
  %318 = vmatprep.subr.mxu0 0.0
  %319 = vmatpush1.msra.mxu0 0.0
  %320 = vmatprep.subr.mxu0 0.0
  %321 = vmatpush1.msra.mxu0 0.0
  %322 = vmatprep.subr.mxu0 0.0
  %323 = vmatpush1.msra.mxu0 0.0
  %324 = vmatprep.subr.mxu0 0.0
  %325 = vmatpush1.msra.mxu0 0.0
  %326 = vmatprep.subr.mxu0 0.0
  %327 = vmatpush1.msra.mxu0 0.0
  %328 = vmatprep.subr.mxu0 0.0
  %329 = vmatpush1.msra.mxu0 0.0
  %330 = vmatprep.subr.mxu0 0.0
  %331 = vmatpush1.msra.mxu0 0.0
  %332 = vmatprep.subr.mxu0 0.0
  %333 = vmatpush1.msra.mxu0 0.0
  %334 = vmatprep.subr.mxu0 0.0
  %335 = vmatpush1.msra.mxu0 0.0
  %336 = vmatprep.subr.mxu0 0.0
  %337 = vmatpush1.msra.mxu0 0.0
  %338 = vmatprep.subr.mxu0 0.0
  %339 = vmatpush1.msra.mxu0 0.0
  %340 = vmatprep.mubr.f32.mxu0 0.0
  %341 = vmatmul.mubr.f32.gmra.mrb[0].mxu0 %v271
  %v342 = vpop.f32.mrb[0].mxu0
  %v343 = vadd.f32 0.0, %v342
  %v344 = vpop.f32.mrb[0].mxu0
  %345 = vmatprep.mubr.f32.mxu0 0.0
  %346 = vmatmul.mubr.f32.gmra.mrb[0].mxu0 %v274
  %v347 = vpop.f32.mrb[0].mxu0
  %v348 = vadd.f32 0.0, %v347
  %v349 = vpop.f32.mrb[0].mxu0
  %350 = vdwg.mxu0
  %v351 = vxor.u32 %v343, 2147483648
  %v352 = vxor.u32 %v348, 2147483648
  %v353 = vmul.f32 %v351, 1.442695
  %v354 = vpow.pop %v353
  %v355 = vmul.f32 %v352, 1.442695
  %v356 = vpow.pop %v355
  %v357 = vadd.f32 %v354, 1.0
  %v358 = vadd.f32 %v356, 1.0
  %v359 = vrcp.pop %v357
  %v360 = vmul.f32 1.0, %v359
  %v361 = vrcp.pop %v358
  %v362 = vmul.f32 1.0, %v361
  %v363 = vld [vmem:[%s4] sm:$0xf]
  %vm364 = vcmask 31744
  %v366 = vsel %vm364, %v360, 0
  %v369 = vsel %vm364, %v362, 0
  %vm371 = vcmask 1043456
  %v373 = vsel %vm371, %v363, 0
  %375 = vmatprep.subr.mxu0 0.0
  %376 = vmatpush1.msra.mxu0 %v373
  %377 = vmatprep.subr.mxu0 0.0
  %378 = vmatpush1.msra.mxu0 0.0
  %379 = vmatprep.subr.mxu0 0.0
  %380 = vmatpush1.msra.mxu0 0.0
  %381 = vmatprep.subr.mxu0 0.0
  %382 = vmatpush1.msra.mxu0 0.0
  %383 = vmatprep.subr.mxu0 0.0
  %384 = vmatpush1.msra.mxu0 0.0
  %385 = vmatprep.subr.mxu0 0.0
  %386 = vmatpush1.msra.mxu0 0.0
  %387 = vmatprep.subr.mxu0 0.0
  %388 = vmatpush1.msra.mxu0 0.0
  %389 = vmatprep.subr.mxu0 0.0
  %390 = vmatpush1.msra.mxu0 0.0
  %391 = vmatprep.subr.mxu0 0.0
  %392 = vmatpush1.msra.mxu0 0.0
  %393 = vmatprep.subr.mxu0 0.0
  %394 = vmatpush1.msra.mxu0 0.0
  %395 = vmatprep.subr.mxu0 0.0
  %396 = vmatpush1.msra.mxu0 0.0
  %397 = vmatprep.subr.mxu0 0.0
  %398 = vmatpush1.msra.mxu0 0.0
  %399 = vmatprep.subr.mxu0 0.0
  %400 = vmatpush1.msra.mxu0 0.0
  %401 = vmatprep.subr.mxu0 0.0
  %402 = vmatpush1.msra.mxu0 0.0
  %403 = vmatprep.subr.mxu0 0.0
  %404 = vmatpush1.msra.mxu0 0.0
  %405 = vmatprep.subr.mxu0 0.0
  %406 = vmatpush1.msra.mxu0 0.0
  %407 = vmatprep.subr.mxu0 0.0
  %408 = vmatpush1.msra.mxu0 0.0
  %409 = vmatprep.subr.mxu0 0.0
  %410 = vmatpush1.msra.mxu0 0.0
  %411 = vmatprep.subr.mxu0 0.0
  %412 = vmatpush1.msra.mxu0 0.0
  %413 = vmatprep.subr.mxu0 0.0
  %414 = vmatpush1.msra.mxu0 0.0
  %415 = vmatprep.subr.mxu0 0.0
  %416 = vmatpush1.msra.mxu0 0.0
  %417 = vmatprep.subr.mxu0 0.0
  %418 = vmatpush1.msra.mxu0 0.0
  %419 = vmatprep.subr.mxu0 0.0
  %420 = vmatpush1.msra.mxu0 0.0
  %421 = vmatprep.subr.mxu0 0.0
  %422 = vmatpush1.msra.mxu0 0.0
  %423 = vmatprep.subr.mxu0 0.0
  %424 = vmatpush1.msra.mxu0 0.0
  %425 = vmatprep.subr.mxu0 0.0
  %426 = vmatpush1.msra.mxu0 0.0
  %427 = vmatprep.subr.mxu0 0.0
  %428 = vmatpush1.msra.mxu0 0.0
  %429 = vmatprep.subr.mxu0 0.0
  %430 = vmatpush1.msra.mxu0 0.0
  %431 = vmatprep.subr.mxu0 0.0
  %432 = vmatpush1.msra.mxu0 0.0
  %433 = vmatprep.subr.mxu0 0.0
  %434 = vmatpush1.msra.mxu0 0.0
  %435 = vmatprep.subr.mxu0 0.0
  %436 = vmatpush1.msra.mxu0 0.0
  %437 = vmatprep.subr.mxu0 0.0
  %438 = vmatpush1.msra.mxu0 0.0
  %439 = vmatprep.mubr.f32.mxu0 0.0
  %440 = vmatmul.mubr.f32.gmra.mrb[0].mxu0 %v366
  %v441 = vpop.f32.mrb[0].mxu0
  %v442 = vadd.f32 0.0, %v441
  %v443 = vpop.f32.mrb[0].mxu0
  %444 = vmatprep.mubr.f32.mxu0 0.0
  %445 = vmatmul.mubr.f32.gmra.mrb[0].mxu0 %v369
  %v446 = vpop.f32.mrb[0].mxu0
  %v447 = vadd.f32 0.0, %v446
  %v448 = vpop.f32.mrb[0].mxu0
  %449 = vdwg.mxu0
  %v450 = vmul.f32 %v253, %v442
  %v451 = vmul.f32 %v257, %v447
  %v452 = vrot.slane %v450, 4
  %v453 = vadd.f32 %v450, %v452
  %v454 = vrot.slane %v453, 2
  %v455 = vadd.f32 %v453, %v454
  %v456 = vrot.slane %v455, 1
  %v457 = vadd.f32 %v455, %v456
  %v458 = vrot.slane %v451, 4
  %v459 = vadd.f32 %v451, %v458
  %v460 = vrot.slane %v459, 2
  %v461 = vadd.f32 %v459, %v460
  %v462 = vrot.slane %v461, 1
  %v463 = vadd.f32 %v461, %v462
  %v464 = vsel %vm364, %v360, 0.0
  %v465 = vrot.slane %v464, 4
  %v466 = vadd.f32 %v464, %v465
  %v467 = vrot.slane %v466, 2
  %v468 = vadd.f32 %v466, %v467
  %v469 = vrot.slane %v468, 1
  %v470 = vadd.f32 %v468, %v469
  %v471 = vsel %vm364, %v362, 0.0
  %v472 = vrot.slane %v471, 4
  %v473 = vadd.f32 %v471, %v472
  %v474 = vrot.slane %v473, 2
  %v475 = vadd.f32 %v473, %v474
  %v476 = vrot.slane %v475, 1
  %v477 = vadd.f32 %v475, %v476
  %vm480 = vcmask 1041409
  %v481 = vsel %vm480, %v477, %v470
  %v482 = vsel %vm364, %v481, 0
  %484 = vmatprep.subr.mxu0 0.0
  %485 = vmatpush1.msra.mxu0 %v373
  %486 = vmatprep.subr.mxu0 0.0
  %487 = vmatpush1.msra.mxu0 0.0
  %488 = vmatprep.subr.mxu0 0.0
  %489 = vmatpush1.msra.mxu0 0.0
  %490 = vmatprep.subr.mxu0 0.0
  %491 = vmatpush1.msra.mxu0 0.0
  %492 = vmatprep.subr.mxu0 0.0
  %493 = vmatpush1.msra.mxu0 0.0
  %494 = vmatprep.subr.mxu0 0.0
  %495 = vmatpush1.msra.mxu0 0.0
  %496 = vmatprep.subr.mxu0 0.0
  %497 = vmatpush1.msra.mxu0 0.0
  %498 = vmatprep.subr.mxu0 0.0
  %499 = vmatpush1.msra.mxu0 0.0
  %500 = vmatprep.subr.mxu0 0.0
  %501 = vmatpush1.msra.mxu0 0.0
  %502 = vmatprep.subr.mxu0 0.0
  %503 = vmatpush1.msra.mxu0 0.0
  %504 = vmatprep.subr.mxu0 0.0
  %505 = vmatpush1.msra.mxu0 0.0
  %506 = vmatprep.subr.mxu0 0.0
  %507 = vmatpush1.msra.mxu0 0.0
  %508 = vmatprep.subr.mxu0 0.0
  %509 = vmatpush1.msra.mxu0 0.0
  %510 = vmatprep.subr.mxu0 0.0
  %511 = vmatpush1.msra.mxu0 0.0
  %512 = vmatprep.subr.mxu0 0.0
  %513 = vmatpush1.msra.mxu0 0.0
  %514 = vmatprep.subr.mxu0 0.0
  %515 = vmatpush1.msra.mxu0 0.0
  %516 = vmatprep.subr.mxu0 0.0
  %517 = vmatpush1.msra.mxu0 0.0
  %518 = vmatprep.subr.mxu0 0.0
  %519 = vmatpush1.msra.mxu0 0.0
  %520 = vmatprep.subr.mxu0 0.0
  %521 = vmatpush1.msra.mxu0 0.0
  %522 = vmatprep.subr.mxu0 0.0
  %523 = vmatpush1.msra.mxu0 0.0
  %524 = vmatprep.subr.mxu0 0.0
  %525 = vmatpush1.msra.mxu0 0.0
  %526 = vmatprep.subr.mxu0 0.0
  %527 = vmatpush1.msra.mxu0 0.0
  %528 = vmatprep.subr.mxu0 0.0
  %529 = vmatpush1.msra.mxu0 0.0
  %530 = vmatprep.subr.mxu0 0.0
  %531 = vmatpush1.msra.mxu0 0.0
  %532 = vmatprep.subr.mxu0 0.0
  %533 = vmatpush1.msra.mxu0 0.0
  %534 = vmatprep.subr.mxu0 0.0
  %535 = vmatpush1.msra.mxu0 0.0
  %536 = vmatprep.subr.mxu0 0.0
  %537 = vmatpush1.msra.mxu0 0.0
  %538 = vmatprep.subr.mxu0 0.0
  %539 = vmatpush1.msra.mxu0 0.0
  %540 = vmatprep.subr.mxu0 0.0
  %541 = vmatpush1.msra.mxu0 0.0
  %542 = vmatprep.subr.mxu0 0.0
  %543 = vmatpush1.msra.mxu0 0.0
  %544 = vmatprep.subr.mxu0 0.0
  %545 = vmatpush1.msra.mxu0 0.0
  %546 = vmatprep.subr.mxu0 0.0
  %547 = vmatpush1.msra.mxu0 0.0
  %548 = vmatprep.mubr.f32.mxu0 0.0
  %549 = vmatmul.mubr.f32.gmra.mrb[0].mxu0 %v482
  %v550 = vpop.f32.mrb[0].mxu0
  %v551 = vadd.f32 0.0, %v550
  %v552 = vpop.f32.mrb[0].mxu0
  %553 = vdwg.mxu0
  %v555 = vrot.slane %v551, 1
  %v558 = vrcp.pop %v551
  %v559 = vmul.f32 %v457, %v558
  %v560 = vrcp.pop %v555
  %v561 = vmul.f32 %v463, %v560
  %v564 = vrot.slane %v561, 7
  %v565 = vsel %vm480, %v564, %v559
  %567 = vst [vmem:[%s5] sm:$0x3] %v565
  // Predicated region
  $region22: #{c_ta_forward.1} parent=0 // pred_check
    _
  $region23: #{c_ta_forward.1} parent=0 // pred_check_branch
    %569 = sbr.rel (0) target = $region25
  $region24: #{c_ta_forward.1} parent=0 // pred_region
    _
  $region25: #{c_ta_forward.1} parent=0 // pred_fallthru
    _
  // Predicated region
  $region26: #{c_ta_forward.1} parent=0 // pred_check
    _
  $region27: #{c_ta_forward.1} parent=0 // pred_check_branch
    %571 = sbr.rel (0) target = $region29
  $region28: #{c_ta_forward.1} parent=0 // pred_region
    _
  $region29: #{c_ta_forward.1} parent=0 // pred_fallthru
    _

</llo_original>
